<compile_context>
chip_gen: v7x
topology: tpu7x:2x2x1
jax: 0.10.0
libtpu: 0.0.40
codegen_flags: <defaults>
</compile_context>

<pallas_src>
import jax
import jax.numpy as jnp
import numpy as np
from jax.experimental import pallas as pl
from jax.experimental.pallas import tpu as pltpu


def _upsample_kernel(x_ref, r_ref, o_ref):
    # x_ref: (TM, G*W)        batched input rows
    # r_ref: (G*W, G*s*s*W)   constant one-hot replication matrix (same every step)
    # o_ref: (TM, G*s*s*W)    upsampled rows (lane-dense last dim)
    o_ref[...] = jnp.dot(
        x_ref[...], r_ref[...], preferred_element_type=jnp.float32
    ).astype(o_ref.dtype)


def _replication_matrix(w: int, s: int, g: int) -> np.ndarray:
    """One-hot matrix mapping G packed input rows -> G*s packed output rows."""
    ws = w * s
    k = np.arange(g * s * ws)
    src = (k // (s * ws)) * w + (k % ws) // s
    mat = np.zeros((g * w, g * s * ws), dtype=np.float32)
    mat[src, k] = 1.0
    return mat


def _pick_group(h: int, w: int, s: int) -> int:
    """Smallest divisor G of H such that the output row length G*s*s*W >= 128 lanes."""
    target = max(1, -(-128 // (s * s * w)))  # ceil(128 / (s*s*w))
    for g in range(1, h + 1):
        if h % g == 0 and g >= target:
            return g
    return h


def _pick_row_tile(rows: int, in_cols: int, out_cols: int, itemsize: int,
                   r_bytes: int) -> int:
    """Largest row tile (multiple of 8) whose double-buffered blocks fit VMEM."""
    budget = 24 * 1024 * 1024 - r_bytes            # headroom for v7x's 64 MiB VMEM
    per_row = 2 * (in_cols + out_cols) * itemsize  # in + out, double-buffered
    max_tm = max(8, budget // per_row)
    tm = min(rows, max_tm, 1024)
    if tm >= rows and rows >= 16:
        tm = (rows + 1) // 2        # >= 2 grid steps so 2-TensorCore chips split work
    if tm < rows:
        tm = max(8, (tm // 8) * 8)  # sublane alignment when not the full extent
    return min(tm, rows)


def basic_upsample(x: jax.Array, scale_factor: int) -> jax.Array:
    """Nearest-neighbor upsample of an NCHW tensor by an integer scale factor."""
    n, c, h, w = x.shape
    s = int(scale_factor)
    # TODO(synk): non-integer scale factors (allowed by nn.Upsample) are not supported.
    hs, ws = h * s, w * s

    # Integer/bool inputs: MXU has no int path on v7x, so compute in f32.
    # TODO(synk): integers with |x| >= 2**24 would lose precision in this f32 MXU
    # path; a pure copy/broadcast kernel would be needed for full-range int exactness.
    compute_dtype = x.dtype if jnp.issubdtype(x.dtype, jnp.floating) else jnp.float32
    itemsize = jnp.dtype(compute_dtype).itemsize

    g = _pick_group(h, w, s)
    rows = (n * c * h) // g
    in_cols = g * w
    out_cols = g * s * s * w

    r_np = _replication_matrix(w, s, g)
    r_mat = jnp.asarray(r_np, dtype=compute_dtype)
    r_bytes = r_np.size * itemsize
    # TODO(synk): for very large W (s*s*W*W*itemsize approaching VMEM), tile W with an
    # extra grid axis instead of a full-width replication matrix.

    tm = _pick_row_tile(rows, in_cols, out_cols, itemsize, r_bytes)
    grid = (pl.cdiv(rows, tm),)

    x2d = x.reshape(rows, in_cols).astype(compute_dtype)

    flops = 2 * rows * in_cols * out_cols
    bytes_accessed = (rows * in_cols + rows * out_cols) * itemsize + r_bytes
    vmem_needed = 2 * tm * (in_cols + out_cols) * itemsize + r_bytes
    vmem_limit = int(min(100 * 1024 * 1024,
                         max(32 * 1024 * 1024, 2 * vmem_needed)))

    out2d = pl.pallas_call(
        _upsample_kernel,
        out_shape=jax.ShapeDtypeStruct((rows, out_cols), compute_dtype),
        grid=grid,
        in_specs=[
            pl.BlockSpec((tm, in_cols), lambda i: (i, 0)),
            pl.BlockSpec((in_cols, out_cols), lambda i: (0, 0)),
        ],
        out_specs=pl.BlockSpec((tm, out_cols), lambda i: (i, 0)),
        compiler_params=pltpu.CompilerParams(
            dimension_semantics=("parallel",),
            vmem_limit_bytes=vmem_limit,
        ),
        cost_estimate=pl.CostEstimate(
            flops=flops, transcendentals=0, bytes_accessed=bytes_accessed),
    )(x2d, r_mat)

    out = out2d.reshape(n, c, hs, ws)
    if out.dtype != x.dtype:
        out = out.astype(x.dtype)
    return out


if __name__ == "__main__":
    key = jax.random.PRNGKey(0)
    N, C, H, W = 2, 4, 16, 16
    scale = 2

    x = jax.random.normal(key, (N, C, H, W), dtype=jnp.float32)

    y = basic_upsample(x, scale)
    jax.block_until_ready(y)

    # Reference: numpy nearest upsample (matches torch nn.Upsample 'nearest').
    x_np = np.asarray(x)
    ref = x_np.repeat(scale, axis=2).repeat(scale, axis=3)
    assert y.shape == (N, C, H * scale, W * scale), y.shape
    np.testing.assert_allclose(np.asarray(y), ref, rtol=0, atol=0)

    print("KERNEL_OK")
</pallas_src>

<mosaic_0001>
module attributes {stable_mosaic.version = 11 : i64} {
  func.func @_upsample_kernel(%arg0: i32, %arg1: memref<32x32xf32, #tpu.memory_space<vmem>>, %arg2: memref<32x128xf32, #tpu.memory_space<vmem>>, %arg3: memref<32x128xf32, #tpu.memory_space<vmem>>) attributes {dimension_semantics = [#tpu.dimension_semantics<parallel>], iteration_bounds = array<i64: 2>, scalar_prefetch = 0 : i64, scratch_operands = 0 : i64, tpu.core_type = #tpu.core_type<tc>, window_params = [{transform_indices = @transform_0, window_bounds = array<i64: 32, 32>}, {pipeline_mode = #tpu.pipeline_mode<synchronous>, transform_indices = @transform_1, window_bounds = array<i64: 32, 128>}, {transform_indices = @transform_2, window_bounds = array<i64: 32, 128>}]} {
    %c0 = arith.constant 0 : index
    %c0_0 = arith.constant 0 : index
    %0 = vector.load %arg1[%c0, %c0_0] : memref<32x32xf32, #tpu.memory_space<vmem>>, vector<32x32xf32>
    %c0_1 = arith.constant 0 : index
    %c0_2 = arith.constant 0 : index
    %1 = vector.load %arg2[%c0_1, %c0_2] : memref<32x128xf32, #tpu.memory_space<vmem>>, vector<32x128xf32>
    %cst = arith.constant dense<0.000000e+00> : vector<32x128xf32>
    %2 = tpu.matmul %0, %1, %cst {dimension_numbers = #tpu.dot_dimension_numbers<[1], [0], [0], [1], [0, 0, 1, 1], [], []>} : vector<32x32xf32>, vector<32x128xf32>, vector<32x128xf32> -> vector<32x128xf32>
    %c0_3 = arith.constant 0 : index
    %c0_4 = arith.constant 0 : index
    %3 = vector.load %arg3[%c0_3, %c0_4] : memref<32x128xf32, #tpu.memory_space<vmem>>, vector<32x128xf32>
    tpu.vector_store %arg3[%c0_3, %c0_4], %2 {strides = array<i32>} : memref<32x128xf32, #tpu.memory_space<vmem>>, vector<32x128xf32>,
    return
  }
  func.func @transform_0(%arg0: i32) -> (i32, i32) {
    %c0_i32 = arith.constant 0 : i32
    %c0_i32_0 = arith.constant 0 : i32
    return %arg0, %c0_i32 : i32, i32
  }
  func.func @transform_1(%arg0: i32) -> (i32, i32) {
    %c0_i32 = arith.constant 0 : i32
    %c0_i32_0 = arith.constant 0 : i32
    %c0_i32_1 = arith.constant 0 : i32
    return %c0_i32, %c0_i32_0 : i32, i32
  }
  func.func @transform_2(%arg0: i32) -> (i32, i32) {
    %c0_i32 = arith.constant 0 : i32
    %c0_i32_0 = arith.constant 0 : i32
    return %arg0, %c0_i32 : i32, i32
  }
}

</mosaic_0001>

<llo_original>
// kernel: tpu_custom_call.1
$region0: #{tpu_custom_call.1}
  #allocation0 [shape = 'u32[]', space=smem, size = 0x4, offset = 0x4, fixed_abs, tag = 'smem constant byte address 0x4 - core index']
  #allocation1 [shape = 'u32[144,128]{1,0:T(1,128)}', space=vmem, size = 0x12000, scoped, tag = 'internal scratch']
  %s0 = inlined_call_operand.vmem [shape: f32[64,32], index: 0, kind: input, shape index: {}]
  %s1 = inlined_call_operand.vmem [shape: f32[32,128], index: 1, kind: input, shape index: {}]
  %s2 = inlined_call_operand.hbm [shape: f32[64,128], index: 2, kind: output, shape index: {}]
  %s3 = sld [smem:[#allocation0]]
  $region41: #{tpu_custom_call.1} parent=0
    _
  %s5 = ssub.s32 1, %s3
  %s6 = scalar_select 0, %s5, %s3
  $region1: #{tpu_custom_call.1} parent=0
    #allocation2 [shape = 'u8[32768]{0}', space=vmem, size = 0x8000, scoped, tag = 'output window, operand 0']
    #allocation3 [shape = 's32[2]{0}', space=sflag, size = 0x8, scoped, tag = 'scoped memory for tpu_custom_call.1']
    %7 = vsyncpa [#allocation3], 0
    %s8 = scalar_lea.sflag [#allocation3], 1
    %9 = vsyncpa %s8, 0
    loop: start=0, step=1, limit=4
    $region2: #{tpu_custom_call.1} parent=1 // loop_pre_header
      _
    $region3: #{tpu_custom_call.1} parent=1 // loop_header
      %s11 = sphi 0, %s15
      %p12 = scmp.ge.s32.totalorder %s11, 4
      %s21 = sphi 0, %s23
      %s24 = sphi 0, %s21
      %s25 = sphi 0, %s24
      %s41 = sphi 0, %s25
      %s45 = sphi 0, %s45
      %s47 = sphi 0, %s45
      %s48 = sphi 0, %s47
      %s62 = sphi 0, %s48
      %s68 = sphi 0, %s70
      %s71 = sphi 0, %s68
      %s72 = sphi 0, %s71
      %s88 = sphi 0, %s72
    $region4: #{tpu_custom_call.1} parent=1 // loop_header_branch
      %14 = sbr.rel (%p12) target = $region8
    $region5: #{tpu_custom_call.1} parent=1 // loop_body
      %s16 = ssub.s32 %s11, 1
      %s17 = ssub.s32 %s11, 2
      %s18 = sadd.s32 %s11, 1
      %s19 = ssub.s32 %s11, %s18
      %p20 = scmp.eq.s32.totalorder %s19, 0
      %s22 = sadd.s32 %s21, 1
      %s23 = scalar_select %p20, %s21, %s22
      %p26 = pneg %p20
      %p27 = scmp.eq.s32.totalorder %s11, 1
      %p28 = por %p26, %p27
      %p29 = scmp.ne.s32.totalorder %s21, %s24
      %p30 = scmp.eq.s32.totalorder %s11, 0
      %p31 = por %p29, %p30
      %p32 = scmp.ne.s32.totalorder %s21, %s24
      %p33 = scmp.eq.s32.totalorder %s16, 1
      %p34 = por %p32, %p33
      %p35 = scmp.ne.s32.totalorder %s24, %s25
      %p36 = scmp.eq.s32.totalorder %s16, 0
      %p37 = por %p35, %p36
      %p38 = scmp.ne.s32.totalorder %s24, %s25
      %p39 = scmp.eq.s32.totalorder %s17, 1
      %p40 = por %p38, %p39
      %p42 = scmp.ne.s32.totalorder %s25, %s41
      %p43 = scmp.eq.s32.totalorder %s17, 0
      %p44 = por %p42, %p43
      %s46 = sadd.s32 %s45, 1
      %p49 = scmp.eq.s32.totalorder %s11, 1
      %p50 = scmp.ne.s32.totalorder %s45, %s47
      %p51 = scmp.eq.s32.totalorder %s11, 0
      %p52 = por %p50, %p51
      %p53 = scmp.ne.s32.totalorder %s45, %s47
      %p54 = scmp.eq.s32.totalorder %s16, 1
      %p55 = por %p53, %p54
      %p56 = scmp.ne.s32.totalorder %s47, %s48
      %p57 = scmp.eq.s32.totalorder %s16, 0
      %p58 = por %p56, %p57
      %p59 = scmp.ne.s32.totalorder %s47, %s48
      %p60 = scmp.eq.s32.totalorder %s17, 1
      %p61 = por %p59, %p60
      %p63 = scmp.ne.s32.totalorder %s48, %s62
      %p64 = scmp.eq.s32.totalorder %s17, 0
      %p65 = por %p63, %p64
      %s66 = ssub.s32 %s11, %s18
      %p67 = scmp.eq.s32.totalorder %s66, 0
      %s69 = sadd.s32 %s68, 1
      %s70 = scalar_select %p67, %s68, %s69
      %p73 = pneg %p67
      %p74 = scmp.eq.s32.totalorder %s11, 1
      %p75 = por %p73, %p74
      %p76 = scmp.ne.s32.totalorder %s68, %s71
      %p77 = scmp.eq.s32.totalorder %s11, 0
      %p78 = por %p76, %p77
      %p79 = scmp.ne.s32.totalorder %s68, %s71
      %p80 = scmp.eq.s32.totalorder %s16, 1
      %p81 = por %p79, %p80
      %p82 = scmp.ne.s32.totalorder %s71, %s72
      %p83 = scmp.eq.s32.totalorder %s16, 0
      %p84 = por %p82, %p83
      %p85 = scmp.ne.s32.totalorder %s71, %s72
      %p86 = scmp.eq.s32.totalorder %s17, 1
      %p87 = por %p85, %p86
      %p89 = scmp.ne.s32.totalorder %s72, %s88
      %p90 = scmp.eq.s32.totalorder %s17, 0
      %p91 = por %p89, %p90
      %p92 = scmp.le.s32.totalorder 1, %s11
      %p93 = scmp.lt.s32.totalorder %s11, 3
      %p94 = pnand %p92, %p93
      %p95 = pneg %p94
      // Predicated region
      $region9: #{tpu_custom_call.1} parent=5 // pred_check
        _
      $region10: #{tpu_custom_call.1} parent=5 // pred_check_branch
        %97 = sbr.rel (%p94) target = $region12
      $region11: #{tpu_custom_call.1} parent=5 // pred_region
        %s98 = ssub.s32 %s11, 1
        // Predicated region
        $region13: #{tpu_custom_call.1} parent=11 // pred_check
          %p99 = pneg %p58
        $region14: #{tpu_custom_call.1} parent=11 // pred_check_branch
          %101 = sbr.rel (%p99) target = $region16
        $region15: #{tpu_custom_call.1} parent=11 // pred_region
          _
        $region16: #{tpu_custom_call.1} parent=11 // pred_fallthru
          _
      $region12: #{tpu_custom_call.1} parent=5 // pred_fallthru
        _
      %p102 = scmp.lt.s32.totalorder %s11, 2
      // Predicated region
      $region17: #{tpu_custom_call.1} parent=5 // pred_check
        %p103 = pneg %p102
      $region18: #{tpu_custom_call.1} parent=5 // pred_check_branch
        %105 = sbr.rel (%p103) target = $region20
      $region19: #{tpu_custom_call.1} parent=5 // pred_region
        // Predicated region
        $region21: #{tpu_custom_call.1} parent=19 // pred_check
          %p106 = pneg %p31
        $region22: #{tpu_custom_call.1} parent=19 // pred_check_branch
          %108 = sbr.rel (%p106) target = $region24
        $region23: #{tpu_custom_call.1} parent=19 // pred_region
          %s109 = smul.u32 4, %s11
          %p110 = scmp.lt.s32.totalorder %s109, 7
          %s111 = scalar_select %p110, %s109, 7
          %s112 = smul.addr %s111, 8
          %s113 = scalar_lea.vmem %s0, %s112
          %s114 = smul.u32 4, %s11
        $region24: #{tpu_custom_call.1} parent=19 // pred_fallthru
          _
      $region20: #{tpu_custom_call.1} parent=5 // pred_fallthru
        _
      %p115 = scmp.le.s32.totalorder 1, %s11
      %p116 = scmp.lt.s32.totalorder %s11, 3
      %p117 = pnand %p115, %p116
      %p118 = pneg %p117
      // Predicated region
      $region25: #{tpu_custom_call.1} parent=5 // pred_check
        _
      $region26: #{tpu_custom_call.1} parent=5 // pred_check_branch
        %120 = sbr.rel (%p117) target = $region28
      $region27: #{tpu_custom_call.1} parent=5 // pred_region
        %s121 = ssub.s32 %s11, 1
        %s122 = smul.u32 4, %s16
        %p123 = scmp.lt.s32.totalorder %s122, 7
        %s124 = scalar_select %p123, %s122, 7
        %s125 = smul.addr %s124, 8
        %s126 = scalar_lea.vmem %s0, %s125
        %p127 = pneg %p37
        %p128 = pneg %p34
        %p129 = pneg %p58
        %p130 = pneg %p55
        %p131 = pneg %p84
        %p132 = pneg %p81
        %s133 = sand.u32 %s71, 1
        %s134 = scalar_lea.sflag [#allocation3], %s133
        %s135 = sand.u32 %s71, 1
        %s136 = smul.addr %s135, 32
        %s137 = scalar_lea.vmem [#allocation2], %s136
        %s138 = smul.u32 4, %s16
        %p139 = scmp.lt.s32.totalorder %s138, 7
        %s140 = scalar_select %p139, %s138, 7
        %s141 = smul.addr %s140, 8
        %s142 = scalar_lea.vmem %s0, %s141
        %s143 = smul.u32 4, %s16
        %s144 = smul.u32 4, %s16
        %v145 = vld [vmem:[%s142] sm:$0xff]
        %v146 = vld [vmem:[%s142 + $0x8] sm:$0xff]
        %v147 = vld [vmem:[%s142 + $0x10] sm:$0xff]
        %v148 = vld [vmem:[%s142 + $0x18] sm:$0xff]
        %v149 = vld [vmem:[%s1] sm:$0xff]
        %v150 = vld [vmem:[%s1 + $0x8] sm:$0xff]
        %v151 = vld [vmem:[%s1 + $0x10] sm:$0xff]
        %v152 = vld [vmem:[%s1 + $0x18] sm:$0xff]
        %vm153 = vcmask 261120
        %v155 = vsel %vm153, %v145, 0
        %v158 = vsel %vm153, %v146, 0
        %v161 = vsel %vm153, %v147, 0
        %v164 = vsel %vm153, %v148, 0
        %166 = vmatprep.subr.mxu0 0.0
        %167 = vmatpush1.msra.mxu0 %v149
        %168 = vmatprep.subr.mxu0 0.0
        %169 = vmatpush1.msra.mxu0 %v150
        %170 = vmatprep.subr.mxu0 0.0
        %171 = vmatpush1.msra.mxu0 %v151
        %172 = vmatprep.subr.mxu0 0.0
        %173 = vmatpush1.msra.mxu0 %v152
        %174 = vmatprep.subr.mxu0 0.0
        %175 = vmatpush1.msra.mxu0 0.0
        %176 = vmatprep.subr.mxu0 0.0
        %177 = vmatpush1.msra.mxu0 0.0
        %178 = vmatprep.subr.mxu0 0.0
        %179 = vmatpush1.msra.mxu0 0.0
        %180 = vmatprep.subr.mxu0 0.0
        %181 = vmatpush1.msra.mxu0 0.0
        %182 = vmatprep.subr.mxu0 0.0
        %183 = vmatpush1.msra.mxu0 0.0
        %184 = vmatprep.subr.mxu0 0.0
        %185 = vmatpush1.msra.mxu0 0.0
        %186 = vmatprep.subr.mxu0 0.0
        %187 = vmatpush1.msra.mxu0 0.0
        %188 = vmatprep.subr.mxu0 0.0
        %189 = vmatpush1.msra.mxu0 0.0
        %190 = vmatprep.subr.mxu0 0.0
        %191 = vmatpush1.msra.mxu0 0.0
        %192 = vmatprep.subr.mxu0 0.0
        %193 = vmatpush1.msra.mxu0 0.0
        %194 = vmatprep.subr.mxu0 0.0
        %195 = vmatpush1.msra.mxu0 0.0
        %196 = vmatprep.subr.mxu0 0.0
        %197 = vmatpush1.msra.mxu0 0.0
        %198 = vmatprep.subr.mxu0 0.0
        %199 = vmatpush1.msra.mxu0 0.0
        %200 = vmatprep.subr.mxu0 0.0
        %201 = vmatpush1.msra.mxu0 0.0
        %202 = vmatprep.subr.mxu0 0.0
        %203 = vmatpush1.msra.mxu0 0.0
        %204 = vmatprep.subr.mxu0 0.0
        %205 = vmatpush1.msra.mxu0 0.0
        %206 = vmatprep.subr.mxu0 0.0
        %207 = vmatpush1.msra.mxu0 0.0
        %208 = vmatprep.subr.mxu0 0.0
        %209 = vmatpush1.msra.mxu0 0.0
        %210 = vmatprep.subr.mxu0 0.0
        %211 = vmatpush1.msra.mxu0 0.0
        %212 = vmatprep.subr.mxu0 0.0
        %213 = vmatpush1.msra.mxu0 0.0
        %214 = vmatprep.subr.mxu0 0.0
        %215 = vmatpush1.msra.mxu0 0.0
        %216 = vmatprep.subr.mxu0 0.0
        %217 = vmatpush1.msra.mxu0 0.0
        %218 = vmatprep.subr.mxu0 0.0
        %219 = vmatpush1.msra.mxu0 0.0
        %220 = vmatprep.subr.mxu0 0.0
        %221 = vmatpush1.msra.mxu0 0.0
        %222 = vmatprep.subr.mxu0 0.0
        %223 = vmatpush1.msra.mxu0 0.0
        %224 = vmatprep.subr.mxu0 0.0
        %225 = vmatpush1.msra.mxu0 0.0
        %226 = vmatprep.subr.mxu0 0.0
        %227 = vmatpush1.msra.mxu0 0.0
        %228 = vmatprep.subr.mxu0 0.0
        %229 = vmatpush1.msra.mxu0 0.0
        %230 = vmatprep.mubr.f32.mxu0 0.0
        %231 = vmatmul.mubr.f32.gmra.mrb[0].mxu0 %v155
        %v232 = vpop.f32.mrb[0].mxu0
        %v233 = vadd.f32 0.0, %v232
        %v234 = vpop.f32.mrb[0].mxu0
        %235 = vmatprep.mubr.f32.mxu0 0.0
        %236 = vmatmul.mubr.f32.gmra.mrb[0].mxu0 %v158
        %v237 = vpop.f32.mrb[0].mxu0
        %v238 = vadd.f32 0.0, %v237
        %v239 = vpop.f32.mrb[0].mxu0
        %240 = vmatprep.mubr.f32.mxu0 0.0
        %241 = vmatmul.mubr.f32.gmra.mrb[0].mxu0 %v161
        %v242 = vpop.f32.mrb[0].mxu0
        %v243 = vadd.f32 0.0, %v242
        %v244 = vpop.f32.mrb[0].mxu0
        %245 = vmatprep.mubr.f32.mxu0 0.0
        %246 = vmatmul.mubr.f32.gmra.mrb[0].mxu0 %v164
        %v247 = vpop.f32.mrb[0].mxu0
        %v248 = vadd.f32 0.0, %v247
        %v249 = vpop.f32.mrb[0].mxu0
        %250 = vdwg.mxu0
        %251 = vst [vmem:[%s137] sm:$0xff] %v233
        %252 = vst [vmem:[%s137 + $0x8] sm:$0xff] %v238
        %253 = vst [vmem:[%s137 + $0x10] sm:$0xff] %v243
        %254 = vst [vmem:[%s137 + $0x18] sm:$0xff] %v248
        %s255 = sand.u32 %s71, 1
        %s256 = scalar_lea.sflag [#allocation3], %s255
        %s257 = sand.u32 %s71, 1
        %s258 = smul.addr %s257, 32
        %s259 = scalar_lea.vmem [#allocation2], %s258
        // Predicated region
        $region29: #{tpu_custom_call.1} parent=27 // pred_check
          %p260 = pneg %p81
        $region30: #{tpu_custom_call.1} parent=27 // pred_check_branch
          %262 = sbr.rel (%p260) target = $region32
        $region31: #{tpu_custom_call.1} parent=27 // pred_region
          %s263 = smul.u32 4, %s16
          %s265 = ssub.s32 512, 512
          %266 = vsyncadd %s256, %s265
          %s267 = smul.addr %s263, 128
          %s268 = scalar_lea.hbm %s2, %s267
          %s269 = sshll.u32 %s259, 4
          %s270 = int_to_ptr.vmem [resolvable:$true] %s269
          %275 = dma.vmem_to_hbm [thread:$0]  %s270, 512, %s268, %s256, 128, 128, 8
        $region32: #{tpu_custom_call.1} parent=27 // pred_fallthru
          _
      $region28: #{tpu_custom_call.1} parent=5 // pred_fallthru
        _
      %p276 = scmp.le.s32.totalorder 2, %s11
      // Predicated region
      $region33: #{tpu_custom_call.1} parent=5 // pred_check
        %p277 = pneg %p276
      $region34: #{tpu_custom_call.1} parent=5 // pred_check_branch
        %279 = sbr.rel (%p277) target = $region36
      $region35: #{tpu_custom_call.1} parent=5 // pred_region
        %s280 = ssub.s32 %s11, 2
        // Predicated region
        $region37: #{tpu_custom_call.1} parent=35 // pred_check
          %p281 = pneg %p87
        $region38: #{tpu_custom_call.1} parent=35 // pred_check_branch
          %283 = sbr.rel (%p281) target = $region40
        $region39: #{tpu_custom_call.1} parent=35 // pred_region
          %s284 = sand.u32 %s72, 1
          %s285 = scalar_lea.sflag [#allocation3], %s284
          %s286 = sand.u32 %s72, 1
          %s287 = smul.addr %s286, 32
          %s288 = scalar_lea.vmem [#allocation2], %s287
          %289 = dma.done %s285, 512
        $region40: #{tpu_custom_call.1} parent=35 // pred_fallthru
          _
      $region36: #{tpu_custom_call.1} parent=5 // pred_fallthru
        _
    $region6: #{tpu_custom_call.1} parent=1 // loop_footer
      %s15 = sadd.s32 1, %s11
    $region7: #{tpu_custom_call.1} parent=1 // loop_footer_branch
      %10 = sbr.rel target = $region3
    $region8: #{tpu_custom_call.1} parent=1 // loop_exit
      _
    %290 = vsyncpa [#allocation3], 1
    %s291 = scalar_lea.sflag [#allocation3], 1
    %292 = vsyncpa %s291, 1

</llo_original>
